<compile_context>
chip_gen: v6e
topology: v6e:2x2x1
jax: 0.10.0
libtpu: 0.0.40
codegen_flags: <defaults>
</compile_context>

<pallas_src>
import jax
import jax.numpy as jnp
from jax.experimental import pallas as pl
from jax.experimental.pallas import tpu as pltpu

KSIZE = 5
PAD = 2


def conv_relu_kernel(x_ref, rhs_ref, o_ref, lhs_ref):
    # x_ref:   (Bg, H, W)       one batch-slice of the raw input
    # rhs_ref: (K_pad, N_pad)   banded conv weight + bias row (128-padded)
    # o_ref:   (Bg*H, N_pad)    channel-last flat output tile (128-lane dense)
    # lhs_ref: (Bg, H, K_pad)   VMEM scratch holding the im2row LHS
    Bg, H, W = x_ref.shape
    Wp = W + 2 * PAD
    K_real = KSIZE * Wp

    # Pre-zero the scratch: gives the conv zero-padding and the K-pad lanes for
    # free; the 5 row-shifted slabs are then written with static sliced stores.
    lhs_ref[...] = jnp.zeros_like(lhs_ref)
    for ky in range(KSIZE):
        s = ky - PAD                              # vertical tap shift, -2..2
        col0 = ky * Wp + PAD                      # lane offset of this tap's slab
        t0, t1 = max(0, -s), H - max(0, s)        # target (output) rows
        s0, s1 = max(0, s), H - max(0, -s)        # source (input) rows
        lhs_ref[:, t0:t1, col0:col0 + W] = x_ref[:, s0:s1, :].astype(jnp.float32)
    # Ones column aligned with the bias row of the RHS (folds bias into matmul).
    lhs_ref[:, :, K_real:K_real + 1] = jnp.ones((Bg, H, 1), jnp.float32)

    # Single MXU matmul: batch*rows folded into M, conv taps + bias folded into K.
    lhs = lhs_ref[...].reshape(Bg * H, lhs_ref.shape[-1])   # leading-dim merge only
    acc = jnp.dot(lhs, rhs_ref[...], preferred_element_type=jnp.float32)
    o_ref[...] = jnp.maximum(acc, 0.0).astype(o_ref.dtype)  # ReLU, full-lane store


def _build_rhs(weight, bias, W, dtype=jnp.float32):
    """Banded RHS: rhs[ky*Wp + jx, j*C + c] = w[c, 0, ky, jx - j] for
    0 <= jx - j < KSIZE; a bias row at row K_real (aligned with the LHS ones
    column); zero rows / columns up to K_pad x N_pad (multiples of 128)."""
    C = weight.shape[0]
    Wp = W + 2 * PAD
    K_real = KSIZE * Wp
    N = W * C
    K_pad = max(128, pl.cdiv(K_real + 1, 128) * 128)
    N_pad = max(128, pl.cdiv(N, 128) * 128)

    w_t = jnp.transpose(weight[:, 0], (1, 2, 0)).astype(dtype)   # (5, 5, C) = [ky, kx, c]

    # Vectorized banded layout: one gather + one where (no python pad/concat loops).
    jx = jnp.arange(Wp)[:, None]                  # (Wp, 1) padded input column
    j = jnp.arange(W)[None, :]                    # (1, W)  output column
    kx = jx - j                                   # (Wp, W) tap index
    valid = (kx >= 0) & (kx < KSIZE)
    kx_c = jnp.clip(kx, 0, KSIZE - 1)
    band = jnp.where(valid[None, :, :, None], w_t[:, kx_c, :], 0.0)   # (5, Wp, W, C)
    rhs = band.reshape(K_real, N)

    bias_row = jnp.tile(bias.astype(dtype), W)[None, :]               # (1, N)
    rhs = jnp.concatenate(
        [rhs, bias_row, jnp.zeros((K_pad - K_real - 1, N), dtype)], axis=0)
    return jnp.pad(rhs, ((0, 0), (0, N_pad - N)))                     # (K_pad, N_pad)


def _batch_grid(B):
    """One grid step per TensorCore on multi-core chips (v7x) so the batch is
    split across cores; otherwise a single invocation (grid of 1 step)."""
    try:
        cores = int(getattr(pltpu.get_tpu_info(), "num_cores", 1) or 1)
    except Exception:
        cores = 1
    g = max(1, min(cores, B))
    return g if B % g == 0 else 1


def make_conv_layer_2d(weight, bias, B, H, W):
    """Returns a jitted forward for fixed parameters.
    x: (B, H, W) float32; weight: (C, 1, 5, 5) torch OIHW; bias: (C,)."""
    C = weight.shape[0]
    N = W * C
    rhs = _build_rhs(weight, bias, W)             # built once, outside the hot path
    K_pad, N_pad = rhs.shape

    G = _batch_grid(B)
    Bg = B // G

    call = pl.pallas_call(
        conv_relu_kernel,
        out_shape=jax.ShapeDtypeStruct((B * H, N_pad), jnp.float32),
        grid_spec=pltpu.PrefetchScalarGridSpec(
            num_scalar_prefetch=0,
            grid=(G,),
            in_specs=[
                pl.BlockSpec((Bg, H, W), lambda g: (g, 0, 0)),
                pl.BlockSpec((K_pad, N_pad), lambda g: (0, 0)),
            ],
            out_specs=pl.BlockSpec((Bg * H, N_pad), lambda g: (g, 0)),
            scratch_shapes=[pltpu.VMEM((Bg, H, K_pad), jnp.float32)],
        ),
        compiler_params=pltpu.CompilerParams(dimension_semantics=("parallel",)),
        cost_estimate=pl.CostEstimate(
            flops=2 * B * H * K_pad * N_pad,
            transcendentals=0,
            bytes_accessed=4 * (B * H * W + K_pad * N_pad + B * H * N_pad),
        ),
    )

    @jax.jit
    def fwd(x):
        out = call(x, rhs)                        # (B*H, N_pad)
        return out[:, :N].reshape(B, H, N)        # drop lane padding, regroup rows

    return fwd


def reference(x, weight, bias):
    """Pure-JAX reference reproducing the PyTorch forward exactly."""
    y = jax.lax.conv_general_dilated(
        x[:, None, :, :], weight, window_strides=(1, 1),
        padding=[(PAD, PAD), (PAD, PAD)],
        dimension_numbers=("NCHW", "OIHW", "NCHW"),
    ) + bias[None, :, None, None]
    y = jnp.maximum(y, 0.0)
    y = jnp.transpose(y, (0, 2, 3, 1))            # (B, H, W, C)
    return y.reshape(y.shape[0], y.shape[1], -1)


if __name__ == "__main__":
    B, window_size, n_features = 2, 16, 8         # x: (B, window, n_features)
    key = jax.random.PRNGKey(0)
    kx, kw, kb = jax.random.split(key, 3)

    x = jax.random.normal(kx, (B, window_size, n_features), dtype=jnp.float32)
    # deterministic synthetic parameters (Conv2d(1, n_features, 5, padding=2))
    weight = jax.random.normal(kw, (n_features, 1, KSIZE, KSIZE), dtype=jnp.float32) * 0.1
    bias = jax.random.normal(kb, (n_features,), dtype=jnp.float32) * 0.1

    fwd = make_conv_layer_2d(weight, bias, B, window_size, n_features)
    out = jax.block_until_ready(fwd(x))

    ref = reference(x, weight, bias)
    assert out.shape == (B, window_size, n_features * n_features)
    assert jnp.allclose(out, ref, atol=1e-5, rtol=1e-5), "mismatch vs reference"

    print("KERNEL_OK")
</pallas_src>

<mosaic_0001>
module attributes {stable_mosaic.version = 11 : i64} {
  func.func @conv_relu_kernel(%arg0: i32, %arg1: memref<2x16x8xf32, #tpu.memory_space<vmem>>, %arg2: memref<128x128xf32, #tpu.memory_space<vmem>>, %arg3: memref<32x128xf32, #tpu.memory_space<vmem>>, %arg4: memref<2x16x128xf32, #tpu.memory_space<vmem>>) attributes {dimension_semantics = [#tpu.dimension_semantics<parallel>], iteration_bounds = array<i64: 1>, scalar_prefetch = 0 : i64, scratch_operands = 1 : i64, tpu.core_type = #tpu.core_type<tc>, window_params = [{transform_indices = @transform_0, window_bounds = array<i64: 2, 16, 8>}, {pipeline_mode = #tpu.pipeline_mode<synchronous>, transform_indices = @transform_1, window_bounds = array<i64: 128, 128>}, {transform_indices = @transform_2, window_bounds = array<i64: 32, 128>}]} {
    %cst = arith.constant 0.000000e+00 : f32
    %0 = vector.broadcast %cst : f32 to vector<2x16x128xf32>
    %c0 = arith.constant 0 : index
    %c0_0 = arith.constant 0 : index
    %c0_1 = arith.constant 0 : index
    %1 = vector.load %arg4[%c0, %c0_0, %c0_1] : memref<2x16x128xf32, #tpu.memory_space<vmem>>, vector<2x16x128xf32>
    tpu.vector_store %arg4[%c0, %c0_0, %c0_1], %0 {strides = array<i32>} : memref<2x16x128xf32, #tpu.memory_space<vmem>>, vector<2x16x128xf32>,
    %c0_2 = arith.constant 0 : index
    %c0_3 = arith.constant 0 : index
    %c0_4 = arith.constant 0 : index
    %2 = vector.load %arg1[%c0_2, %c0_3, %c0_4] : memref<2x16x8xf32, #tpu.memory_space<vmem>>, vector<2x14x8xf32>
    %c0_5 = arith.constant 0 : index
    %c2 = arith.constant 2 : index
    %c2_6 = arith.constant 2 : index
    %3 = vector.load %arg4[%c0_5, %c2, %c2_6] : memref<2x16x128xf32, #tpu.memory_space<vmem>>, vector<2x14x8xf32>
    tpu.vector_store %arg4[%c0_5, %c2, %c2_6], %2 {strides = array<i32>} : memref<2x16x128xf32, #tpu.memory_space<vmem>>, vector<2x14x8xf32>,
    %c0_7 = arith.constant 0 : index
    %c0_8 = arith.constant 0 : index
    %c0_9 = arith.constant 0 : index
    %4 = vector.load %arg1[%c0_7, %c0_8, %c0_9] : memref<2x16x8xf32, #tpu.memory_space<vmem>>, vector<2x15x8xf32>
    %c0_10 = arith.constant 0 : index
    %c1 = arith.constant 1 : index
    %c14 = arith.constant 14 : index
    %5 = vector.load %arg4[%c0_10, %c1, %c14] : memref<2x16x128xf32, #tpu.memory_space<vmem>>, vector<2x15x8xf32>
    tpu.vector_store %arg4[%c0_10, %c1, %c14], %4 {strides = array<i32>} : memref<2x16x128xf32, #tpu.memory_space<vmem>>, vector<2x15x8xf32>,
    %c0_11 = arith.constant 0 : index
    %c0_12 = arith.constant 0 : index
    %c0_13 = arith.constant 0 : index
    %6 = vector.load %arg1[%c0_11, %c0_12, %c0_13] : memref<2x16x8xf32, #tpu.memory_space<vmem>>, vector<2x16x8xf32>
    %c0_14 = arith.constant 0 : index
    %c0_15 = arith.constant 0 : index
    %c26 = arith.constant 26 : index
    %7 = vector.load %arg4[%c0_14, %c0_15, %c26] : memref<2x16x128xf32, #tpu.memory_space<vmem>>, vector<2x16x8xf32>
    tpu.vector_store %arg4[%c0_14, %c0_15, %c26], %6 {strides = array<i32>} : memref<2x16x128xf32, #tpu.memory_space<vmem>>, vector<2x16x8xf32>,
    %c0_16 = arith.constant 0 : index
    %c1_17 = arith.constant 1 : index
    %c0_18 = arith.constant 0 : index
    %8 = vector.load %arg1[%c0_16, %c1_17, %c0_18] : memref<2x16x8xf32, #tpu.memory_space<vmem>>, vector<2x15x8xf32>
    %c0_19 = arith.constant 0 : index
    %c0_20 = arith.constant 0 : index
    %c38 = arith.constant 38 : index
    %9 = vector.load %arg4[%c0_19, %c0_20, %c38] : memref<2x16x128xf32, #tpu.memory_space<vmem>>, vector<2x15x8xf32>
    tpu.vector_store %arg4[%c0_19, %c0_20, %c38], %8 {strides = array<i32>} : memref<2x16x128xf32, #tpu.memory_space<vmem>>, vector<2x15x8xf32>,
    %c0_21 = arith.constant 0 : index
    %c2_22 = arith.constant 2 : index
    %c0_23 = arith.constant 0 : index
    %10 = vector.load %arg1[%c0_21, %c2_22, %c0_23] : memref<2x16x8xf32, #tpu.memory_space<vmem>>, vector<2x14x8xf32>
    %c0_24 = arith.constant 0 : index
    %c0_25 = arith.constant 0 : index
    %c50 = arith.constant 50 : index
    %11 = vector.load %arg4[%c0_24, %c0_25, %c50] : memref<2x16x128xf32, #tpu.memory_space<vmem>>, vector<2x14x8xf32>
    tpu.vector_store %arg4[%c0_24, %c0_25, %c50], %10 {strides = array<i32>} : memref<2x16x128xf32, #tpu.memory_space<vmem>>, vector<2x14x8xf32>,
    %cst_26 = arith.constant 1.000000e+00 : f32
    %12 = vector.broadcast %cst_26 : f32 to vector<2x16x1xf32>
    %c0_27 = arith.constant 0 : index
    %c0_28 = arith.constant 0 : index
    %c60 = arith.constant 60 : index
    %13 = vector.load %arg4[%c0_27, %c0_28, %c60] : memref<2x16x128xf32, #tpu.memory_space<vmem>>, vector<2x16x1xf32>
    tpu.vector_store %arg4[%c0_27, %c0_28, %c60], %12 {strides = array<i32>} : memref<2x16x128xf32, #tpu.memory_space<vmem>>, vector<2x16x1xf32>,
    %c0_29 = arith.constant 0 : index
    %c0_30 = arith.constant 0 : index
    %c0_31 = arith.constant 0 : index
    %14 = vector.load %arg4[%c0_29, %c0_30, %c0_31] : memref<2x16x128xf32, #tpu.memory_space<vmem>>, vector<2x16x128xf32>
    %15 = vector.shape_cast %14 : vector<2x16x128xf32> to vector<32x128xf32>
    %c0_32 = arith.constant 0 : index
    %c0_33 = arith.constant 0 : index
    %16 = vector.load %arg2[%c0_32, %c0_33] : memref<128x128xf32, #tpu.memory_space<vmem>>, vector<128x128xf32>
    %cst_34 = arith.constant dense<0.000000e+00> : vector<32x128xf32>
    %17 = tpu.matmul %15, %16, %cst_34 {dimension_numbers = #tpu.dot_dimension_numbers<[1], [0], [0], [1], [0, 0, 1, 1], [], []>} : vector<32x128xf32>, vector<128x128xf32>, vector<32x128xf32> -> vector<32x128xf32>
    %cst_35 = arith.constant 0.000000e+00 : f32
    %18 = vector.broadcast %cst_35 : f32 to vector<32x128xf32>
    %19 = arith.maximumf %17, %18 : vector<32x128xf32>
    %c0_36 = arith.constant 0 : index
    %c0_37 = arith.constant 0 : index
    %20 = vector.load %arg3[%c0_36, %c0_37] : memref<32x128xf32, #tpu.memory_space<vmem>>, vector<32x128xf32>
    tpu.vector_store %arg3[%c0_36, %c0_37], %19 {strides = array<i32>} : memref<32x128xf32, #tpu.memory_space<vmem>>, vector<32x128xf32>,
    return
  }
  func.func @transform_0(%arg0: i32) -> (i32, i32, i32) {
    %c0_i32 = arith.constant 0 : i32
    %c0_i32_0 = arith.constant 0 : i32
    %c0_i32_1 = arith.constant 0 : i32
    return %arg0, %c0_i32, %c0_i32_0 : i32, i32, i32
  }
  func.func @transform_1(%arg0: i32) -> (i32, i32) {
    %c0_i32 = arith.constant 0 : i32
    %c0_i32_0 = arith.constant 0 : i32
    %c0_i32_1 = arith.constant 0 : i32
    return %c0_i32, %c0_i32_0 : i32, i32
  }
  func.func @transform_2(%arg0: i32) -> (i32, i32) {
    %c0_i32 = arith.constant 0 : i32
    %c0_i32_0 = arith.constant 0 : i32
    return %arg0, %c0_i32 : i32, i32
  }
}

</mosaic_0001>

<llo_original>
// kernel: fwd.1
$region0: #{fwd.1}
  #allocation0 [shape = 'u32[]', space=smem, size = 0x4, offset = 0x4, fixed_abs, tag = 'smem constant byte address 0x4 - core index']
  #allocation1 [shape = 'u32[144,128]{1,0:T(1,128)}', space=vmem, size = 0x12000, scoped, tag = 'internal scratch']
  #allocation2 [shape = 'f32[2,16,128]{2,1,0:T(8,128)}', space=vmem, size = 0x4000, scoped, tag = 'scratch operand']
  %s0 = inlined_call_operand.vmem [shape: f32[2,16,8], index: 0, kind: input, shape index: {}]
  %s1 = inlined_call_operand.hbm [shape: f32[128,128], index: 1, kind: input, shape index: {}]
  %s2 = inlined_call_operand.hbm [shape: f32[32,128], index: 2, kind: output, shape index: {}]
  %s3 = sld [smem:[#allocation0]]
  $region22: #{fwd.1} parent=0
    _
  %s5 = ssub.s32 1, %s3
  %s6 = scalar_select 0, %s5, %s3
  $region1: #{fwd.1} parent=0
    #allocation3 [shape = 'u8[65536]{0}', space=vmem, size = 0x10000, scoped, tag = 'input window, operand 1, single buffered']
    #allocation4 [shape = 's32[1]{0}', space=sflag, size = 0x4, scoped, tag = 'scoped memory for fwd.1']
    #allocation5 [shape = 's32[1]{0}', space=sflag, size = 0x4, scoped, tag = 'scoped memory for fwd.1']
    #allocation6 [shape = 'u8[16384]{0}', space=vmem, size = 0x4000, scoped, tag = 'output window, operand 0, single buffered']
    %7 = vsyncpa [#allocation4], 0
    %8 = vsyncpa [#allocation5], 0
    // Predicated region
    $region2: #{fwd.1} parent=1 // pred_check
      _
    $region3: #{fwd.1} parent=1 // pred_check_branch
      %10 = sbr.rel (0) target = $region5
    $region4: #{fwd.1} parent=1 // pred_region
      _
    $region5: #{fwd.1} parent=1 // pred_fallthru
      _
    // Predicated region
    $region6: #{fwd.1} parent=1 // pred_check
      _
    $region7: #{fwd.1} parent=1 // pred_check_branch
      %12 = sbr.rel (0) target = $region9
    $region8: #{fwd.1} parent=1 // pred_region
      %s14 = ssub.s32 2048, 2048
      %15 = vsyncadd [#allocation4], %s14
      %s16 = sshll.u32 [#allocation3], 4
      %s17 = int_to_ptr.vmem [resolvable:$true] %s16
      %22 = dma.hbm_to_vmem [thread:$0]  %s1, 2048, %s17, [#allocation4], 128, 128, 8
    $region9: #{fwd.1} parent=1 // pred_fallthru
      _
    // Predicated region
    $region10: #{fwd.1} parent=1 // pred_check
      _
    $region11: #{fwd.1} parent=1 // pred_check_branch
      %24 = sbr.rel (0) target = $region13
    $region12: #{fwd.1} parent=1 // pred_region
      %25 = dma.done [#allocation4], 2048
    $region13: #{fwd.1} parent=1 // pred_fallthru
      _
    %26 = vst [vmem:[#allocation2] sm:$0xff] 0.0
    %27 = vst [vmem:[#allocation2 + $0x8] sm:$0xff] 0.0
    %28 = vst [vmem:[#allocation2 + $0x10] sm:$0xff] 0.0
    %29 = vst [vmem:[#allocation2 + $0x18] sm:$0xff] 0.0
    %v30 = vld [vmem:[%s0] sm:$0xff]
    %v31 = vld [vmem:[%s0 + $0x8] sm:$0x3f]
    %v32 = vld [vmem:[%s0 + $0x10] sm:$0xff]
    %v33 = vld [vmem:[%s0 + $0x18] sm:$0x3f]
    %38 = vrot.lane.b32.xlu0 %v30, 2
    %v39 = vpop.permute.xlu0 %38
    %40 = vrot.lane.b32.xlu0 %v31, 2
    %v41 = vpop.permute.xlu0 %40
    %42 = vrot.lane.b32.xlu0 %v32, 2
    %v43 = vpop.permute.xlu0 %42
    %44 = vrot.lane.b32.xlu0 %v33, 2
    %v45 = vpop.permute.xlu0 %44
    %vm50 = vcmask 80912
    %51 = vst.msk [vmem:[#allocation2 + $0x2] sm:$0xff] %vm50, %v39
    %vm52 = vcmask 78864
    %53 = vst.msk [vmem:[#allocation2 + $0xa] sm:$0x3f] %vm52, %v41
    %54 = vst.msk [vmem:[#allocation2 + $0x12] sm:$0xff] %vm50, %v43
    %55 = vst.msk [vmem:[#allocation2 + $0x1a] sm:$0x3f] %vm52, %v45
    %v56 = vld [vmem:[%s0] sm:$0xff]
    %v57 = vld [vmem:[%s0 + $0x8] sm:$0x7f]
    %v58 = vld [vmem:[%s0 + $0x10] sm:$0xff]
    %v59 = vld [vmem:[%s0 + $0x18] sm:$0x7f]
    %64 = vrot.lane.b32.xlu0 %v56, 14
    %v65 = vpop.permute.xlu0 %64
    %66 = vrot.lane.b32.xlu0 %v57, 14
    %v67 = vpop.permute.xlu0 %66
    %68 = vrot.lane.b32.xlu0 %v58, 14
    %v69 = vpop.permute.xlu0 %68
    %70 = vrot.lane.b32.xlu0 %v59, 14
    %v71 = vpop.permute.xlu0 %70
    %vm76 = vcmask 179312
    %77 = vst.msk [vmem:[#allocation2 + $0x1] sm:$0xff] %vm76, %v65
    %vm78 = vcmask 178288
    %79 = vst.msk [vmem:[#allocation2 + $0x9] sm:$0x7f] %vm78, %v67
    %80 = vst.msk [vmem:[#allocation2 + $0x11] sm:$0xff] %vm76, %v69
    %81 = vst.msk [vmem:[#allocation2 + $0x19] sm:$0x7f] %vm78, %v71
    %v82 = vld [vmem:[%s0] sm:$0xff]
    %v83 = vld [vmem:[%s0 + $0x8] sm:$0xff]
    %v84 = vld [vmem:[%s0 + $0x10] sm:$0xff]
    %v85 = vld [vmem:[%s0 + $0x18] sm:$0xff]
    %90 = vrot.lane.b32.xlu0 %v82, 26
    %v91 = vpop.permute.xlu0 %90
    %92 = vrot.lane.b32.xlu0 %v83, 26
    %v93 = vpop.permute.xlu0 %92
    %94 = vrot.lane.b32.xlu0 %v84, 26
    %v95 = vpop.permute.xlu0 %94
    %96 = vrot.lane.b32.xlu0 %v85, 26
    %v97 = vpop.permute.xlu0 %96
    %vm102 = vcmask 277712
    %103 = vst.msk [vmem:[#allocation2] sm:$0xff] %vm102, %v91
    %104 = vst.msk [vmem:[#allocation2 + $0x8] sm:$0xff] %vm102, %v93
    %105 = vst.msk [vmem:[#allocation2 + $0x10] sm:$0xff] %vm102, %v95
    %106 = vst.msk [vmem:[#allocation2 + $0x18] sm:$0xff] %vm102, %v97
    %v107 = vld [vmem:[%s0 + $0x1] sm:$0xff]
    %v108 = vld [vmem:[%s0 + $0x9] sm:$0x7f]
    %v109 = vld [vmem:[%s0 + $0x11] sm:$0xff]
    %v110 = vld [vmem:[%s0 + $0x19] sm:$0x7f]
    %115 = vrot.lane.b32.xlu0 %v107, 38
    %v116 = vpop.permute.xlu0 %115
    %117 = vrot.lane.b32.xlu0 %v108, 38
    %v118 = vpop.permute.xlu0 %117
    %119 = vrot.lane.b32.xlu0 %v109, 38
    %v120 = vpop.permute.xlu0 %119
    %121 = vrot.lane.b32.xlu0 %v110, 38
    %v122 = vpop.permute.xlu0 %121
    %vm127 = vcmask 376112
    %128 = vst.msk [vmem:[#allocation2] sm:$0xff] %vm127, %v116
    %vm129 = vcmask 375088
    %130 = vst.msk [vmem:[#allocation2 + $0x8] sm:$0x7f] %vm129, %v118
    %131 = vst.msk [vmem:[#allocation2 + $0x10] sm:$0xff] %vm127, %v120
    %132 = vst.msk [vmem:[#allocation2 + $0x18] sm:$0x7f] %vm129, %v122
    %v133 = vld [vmem:[%s0 + $0x2] sm:$0xff]
    %v134 = vld [vmem:[%s0 + $0xa] sm:$0x3f]
    %v135 = vld [vmem:[%s0 + $0x12] sm:$0xff]
    %v136 = vld [vmem:[%s0 + $0x1a] sm:$0x3f]
    %141 = vrot.lane.b32.xlu0 %v133, 50
    %v142 = vpop.permute.xlu0 %141
    %143 = vrot.lane.b32.xlu0 %v134, 50
    %v144 = vpop.permute.xlu0 %143
    %145 = vrot.lane.b32.xlu0 %v135, 50
    %v146 = vpop.permute.xlu0 %145
    %147 = vrot.lane.b32.xlu0 %v136, 50
    %v148 = vpop.permute.xlu0 %147
    %vm153 = vcmask 474512
    %154 = vst.msk [vmem:[#allocation2] sm:$0xff] %vm153, %v142
    %vm155 = vcmask 472464
    %156 = vst.msk [vmem:[#allocation2 + $0x8] sm:$0x3f] %vm155, %v144
    %157 = vst.msk [vmem:[#allocation2 + $0x10] sm:$0xff] %vm153, %v146
    %158 = vst.msk [vmem:[#allocation2 + $0x18] sm:$0x3f] %vm155, %v148
    %vm159 = vcmask 499168
    %160 = vst.msk [vmem:[#allocation2] sm:$0xff] %vm159, 1.0
    %161 = vst.msk [vmem:[#allocation2 + $0x8] sm:$0xff] %vm159, 1.0
    %162 = vst.msk [vmem:[#allocation2 + $0x10] sm:$0xff] %vm159, 1.0
    %163 = vst.msk [vmem:[#allocation2 + $0x18] sm:$0xff] %vm159, 1.0
    %v164 = vld [vmem:[#allocation2] sm:$0xff]
    %v165 = vld [vmem:[#allocation2 + $0x8] sm:$0xff]
    %v166 = vld [vmem:[#allocation2 + $0x10] sm:$0xff]
    %v167 = vld [vmem:[#allocation2 + $0x18] sm:$0xff]
    %v168 = vld [vmem:[#allocation3] sm:$0xff]
    %v169 = vld [vmem:[#allocation3 + $0x8] sm:$0xff]
    %v170 = vld [vmem:[#allocation3 + $0x10] sm:$0xff]
    %v171 = vld [vmem:[#allocation3 + $0x18] sm:$0xff]
    %v172 = vld [vmem:[#allocation3 + $0x20] sm:$0xff]
    %v173 = vld [vmem:[#allocation3 + $0x28] sm:$0xff]
    %v174 = vld [vmem:[#allocation3 + $0x30] sm:$0xff]
    %v175 = vld [vmem:[#allocation3 + $0x38] sm:$0xff]
    %v176 = vld [vmem:[#allocation3 + $0x40] sm:$0xff]
    %v177 = vld [vmem:[#allocation3 + $0x48] sm:$0xff]
    %v178 = vld [vmem:[#allocation3 + $0x50] sm:$0xff]
    %v179 = vld [vmem:[#allocation3 + $0x58] sm:$0xff]
    %v180 = vld [vmem:[#allocation3 + $0x60] sm:$0xff]
    %v181 = vld [vmem:[#allocation3 + $0x68] sm:$0xff]
    %v182 = vld [vmem:[#allocation3 + $0x70] sm:$0xff]
    %v183 = vld [vmem:[#allocation3 + $0x78] sm:$0xff]
    %184 = vmatprep.subr.mxu0 0.0
    %185 = vmatpush1.msra.mxu0 %v183
    %186 = vmatprep.subr.mxu0 0.0
    %187 = vmatpush1.msra.mxu0 %v182
    %188 = vmatprep.subr.mxu0 0.0
    %189 = vmatpush1.msra.mxu0 %v181
    %190 = vmatprep.subr.mxu0 0.0
    %191 = vmatpush1.msra.mxu0 %v180
    %192 = vmatprep.subr.mxu0 0.0
    %193 = vmatpush1.msra.mxu0 %v179
    %194 = vmatprep.subr.mxu0 0.0
    %195 = vmatpush1.msra.mxu0 %v178
    %196 = vmatprep.subr.mxu0 0.0
    %197 = vmatpush1.msra.mxu0 %v177
    %198 = vmatprep.subr.mxu0 0.0
    %199 = vmatpush1.msra.mxu0 %v176
    %200 = vmatprep.subr.mxu0 0.0
    %201 = vmatpush1.msra.mxu0 %v175
    %202 = vmatprep.subr.mxu0 0.0
    %203 = vmatpush1.msra.mxu0 %v174
    %204 = vmatprep.subr.mxu0 0.0
    %205 = vmatpush1.msra.mxu0 %v173
    %206 = vmatprep.subr.mxu0 0.0
    %207 = vmatpush1.msra.mxu0 %v172
    %208 = vmatprep.subr.mxu0 0.0
    %209 = vmatpush1.msra.mxu0 %v171
    %210 = vmatprep.subr.mxu0 0.0
    %211 = vmatpush1.msra.mxu0 %v170
    %212 = vmatprep.subr.mxu0 0.0
    %213 = vmatpush1.msra.mxu0 %v169
    %214 = vmatprep.subr.mxu0 0.0
    %215 = vmatpush1.msra.mxu0 %v168
    %216 = vmatprep.subr.mxu0 0.0
    %217 = vmatpush2.msra.mxu0 0.0
    %218 = vmatprep.subr.mxu0 0.0
    %219 = vmatpush2.msra.mxu0 0.0
    %220 = vmatprep.subr.mxu0 0.0
    %221 = vmatpush2.msra.mxu0 0.0
    %222 = vmatprep.subr.mxu0 0.0
    %223 = vmatpush2.msra.mxu0 0.0
    %224 = vmatprep.subr.mxu0 0.0
    %225 = vmatpush2.msra.mxu0 0.0
    %226 = vmatprep.subr.mxu0 0.0
    %227 = vmatpush2.msra.mxu0 0.0
    %228 = vmatprep.subr.mxu0 0.0
    %229 = vmatpush2.msra.mxu0 0.0
    %230 = vmatprep.subr.mxu0 0.0
    %231 = vmatpush2.msra.mxu0 0.0
    %232 = vmatprep.subr.mxu0 0.0
    %233 = vmatpush2.msra.mxu0 0.0
    %234 = vmatprep.subr.mxu0 0.0
    %235 = vmatpush2.msra.mxu0 0.0
    %236 = vmatprep.subr.mxu0 0.0
    %237 = vmatpush2.msra.mxu0 0.0
    %238 = vmatprep.subr.mxu0 0.0
    %239 = vmatpush2.msra.mxu0 0.0
    %240 = vmatprep.subr.mxu0 0.0
    %241 = vmatpush2.msra.mxu0 0.0
    %242 = vmatprep.subr.mxu0 0.0
    %243 = vmatpush2.msra.mxu0 0.0
    %244 = vmatprep.subr.mxu0 0.0
    %245 = vmatpush2.msra.mxu0 0.0
    %246 = vmatprep.subr.mxu0 0.0
    %247 = vmatpush2.msra.mxu0 0.0
    %248 = vmatprep.mubr.f32.mxu0 0.0
    %249 = vmatmul.mubr.f32.gmra.mxu0 %v164
    %v250 = vpop.f32.mrf.mxu0
    %v251 = vadd.f32 0.0, %v250
    %v252 = vpop.f32.mrf.mxu0
    %253 = vmatprep.mubr.f32.mxu0 0.0
    %254 = vmatmul.mubr.f32.gmra.mxu0 %v165
    %v255 = vpop.f32.mrf.mxu0
    %v256 = vadd.f32 0.0, %v255
    %v257 = vpop.f32.mrf.mxu0
    %258 = vmatprep.mubr.f32.mxu0 0.0
    %259 = vmatmul.mubr.f32.gmra.mxu0 %v166
    %v260 = vpop.f32.mrf.mxu0
    %v261 = vadd.f32 0.0, %v260
    %v262 = vpop.f32.mrf.mxu0
    %263 = vmatprep.mubr.f32.mxu0 0.0
    %264 = vmatmul.mubr.f32.gmra.mxu0 %v167
    %v265 = vpop.f32.mrf.mxu0
    %v266 = vadd.f32 0.0, %v265
    %v267 = vpop.f32.mrf.mxu0
    %268 = vdwg.mxu0
    %v269 = vmax.f32 %v251, 0.0
    %v270 = vmax.f32 %v256, 0.0
    %v271 = vmax.f32 %v261, 0.0
    %v272 = vmax.f32 %v266, 0.0
    %273 = vst [vmem:[#allocation6] sm:$0xff] %v269
    %274 = vst [vmem:[#allocation6 + $0x8] sm:$0xff] %v270
    %275 = vst [vmem:[#allocation6 + $0x10] sm:$0xff] %v271
    %276 = vst [vmem:[#allocation6 + $0x18] sm:$0xff] %v272
    // Predicated region
    $region14: #{fwd.1} parent=1 // pred_check
      _
    $region15: #{fwd.1} parent=1 // pred_check_branch
      %278 = sbr.rel (0) target = $region17
    $region16: #{fwd.1} parent=1 // pred_region
      %s280 = ssub.s32 512, 512
      %281 = vsyncadd [#allocation5], %s280
      %s282 = sshll.u32 [#allocation6], 4
      %s283 = int_to_ptr.vmem [resolvable:$true] %s282
      %288 = dma.vmem_to_hbm [thread:$0]  %s283, 512, %s2, [#allocation5], 128, 128, 8
    $region17: #{fwd.1} parent=1 // pred_fallthru
      _
    // Predicated region
    $region18: #{fwd.1} parent=1 // pred_check
      _
    $region19: #{fwd.1} parent=1 // pred_check_branch
      %290 = sbr.rel (0) target = $region21
    $region20: #{fwd.1} parent=1 // pred_region
      %291 = dma.done [#allocation5], 512
    $region21: #{fwd.1} parent=1 // pred_fallthru
      _
    %292 = vsyncpa [#allocation4], 1
    %293 = vsyncpa [#allocation5], 1

</llo_original>
